<compile_context>
chip_gen: v7x
topology: tpu7x:2x2x1
jax: 0.10.0
libtpu: 0.0.40
codegen_flags: <defaults>
</compile_context>

<pallas_src>
import functools
import math

import jax
import jax.numpy as jnp
from jax.experimental import pallas as pl
from jax.experimental.pallas import tpu as pltpu


def _round_up(x, m):
    return (x + m - 1) // m * m


# ----------------------------- Pallas kernels ------------------------------ #
#
#   t = x @ [W1f | Wef] + [b1 | be]     (conv1+bn1 and 1x1 shortcut, ONE matmul)
#   y = relu(t[:, :Np])                 (conv1 branch)
#   s = t[:, Np:]                       (shortcut branch)
#   z = y @ W2f + b2                    (conv2 + bn2)
#   o = relu(z + s)

def _resblock1x1_extra_kernel(x_ref, w1e_ref, b1e_ref, w2_ref, b2_ref, o_ref,
                              *, n_pad):
    x = x_ref[...]                                               # (TM, Kp) bf16
    t = jnp.dot(x, w1e_ref[...],
                preferred_element_type=jnp.float32) + b1e_ref[...]   # (TM, 2Np)
    y = jnp.maximum(t[:, :n_pad], 0.0)                           # conv1+bn1+relu
    s = t[:, n_pad:]                                             # shortcut+bn
    z = jnp.dot(y.astype(jnp.bfloat16), w2_ref[...],
                preferred_element_type=jnp.float32) + b2_ref[...]
    o_ref[...] = jnp.maximum(z + s, 0.0)


def _resblock1x1_identity_kernel(x_ref, w1_ref, b1_ref, w2_ref, b2_ref, o_ref):
    # Identity shortcut (inc == outc, stride == 1): residual is the input tile.
    x = x_ref[...]
    y = jnp.dot(x, w1_ref[...], preferred_element_type=jnp.float32) + b1_ref[...]
    y = jnp.maximum(y, 0.0)
    z = jnp.dot(y.astype(jnp.bfloat16), w2_ref[...],
                preferred_element_type=jnp.float32) + b2_ref[...]
    o_ref[...] = jnp.maximum(z + x.astype(jnp.float32), 0.0)


def _resblock1x1(rows, p, *, tm_target=512):
    """rows: [M, Cin] f32 -> [M, Cout] f32, fully fused 1x1-conv ResBlock."""
    m, cin = rows.shape
    cout, kp, np_ = p["cout"], p["k_pad"], p["n_pad"]
    has_extra = p["has_extra"]

    # Row tiling: pick n_tiles so the tile is <= tm_target, then round the tile
    # to 8 sublanes -- minimizes padded rows while keeping alignment.
    n_tiles = max(1, pl.cdiv(m, tm_target))
    tm = _round_up(pl.cdiv(m, n_tiles), 8)
    mp = tm * n_tiles
    grid = (n_tiles,)

    # bf16 MXU operands; zero row/col padding keeps padded lanes exactly zero.
    x_pad = jnp.pad(rows, ((0, mp - m), (0, kp - cin))).astype(jnp.bfloat16)

    def whole(shape):
        # Whole-array block, same index every grid step -> stays resident.
        return pl.BlockSpec(shape, lambda *_: (0,) * len(shape))

    x_spec = pl.BlockSpec((tm, kp), lambda i: (i, 0))
    if has_extra:
        in_specs = [x_spec,
                    whole((kp, 2 * np_)), whole((1, 2 * np_)),   # [W1f|Wef], [b1|be]
                    whole((np_, np_)), whole((1, np_))]          # W2f, b2
        args = [x_pad, p["w1e"], p["b1e"], p["w2"], p["b2"]]
        kernel = functools.partial(_resblock1x1_extra_kernel, n_pad=np_)
        flops = 2 * mp * kp * (2 * np_) + 2 * mp * np_ * np_
        bytes_accessed = (mp * kp * 2 + mp * np_ * 4
                          + kp * 2 * np_ * 2 + np_ * np_ * 2 + 3 * np_ * 4)
    else:
        in_specs = [x_spec,
                    whole((kp, np_)), whole((1, np_)),           # W1f, b1
                    whole((np_, np_)), whole((1, np_))]          # W2f, b2
        args = [x_pad, p["w1"], p["b1"], p["w2"], p["b2"]]
        kernel = _resblock1x1_identity_kernel
        flops = 2 * mp * kp * np_ + 2 * mp * np_ * np_
        bytes_accessed = (mp * kp * 2 + mp * np_ * 4
                          + kp * np_ * 2 + np_ * np_ * 2 + 2 * np_ * 4)

    out = pl.pallas_call(
        kernel,
        out_shape=jax.ShapeDtypeStruct((mp, np_), jnp.float32),
        grid=grid,
        in_specs=in_specs,
        out_specs=pl.BlockSpec((tm, np_), lambda i: (i, 0)),
        compiler_params=pltpu.CompilerParams(
            dimension_semantics=("parallel",),     # shard row-tiles across TCs (v7x)
            vmem_limit_bytes=32 * 1024 * 1024),
        cost_estimate=pl.CostEstimate(flops=flops, transcendentals=0,
                                      bytes_accessed=bytes_accessed),
    )(*args)
    return out[:m, :cout]


# ------------------------------- JAX glue ----------------------------------- #

def _conv_params(key, cin, cout, k):
    """PyTorch nn.Conv2d default init (kaiming-uniform bounds)."""
    kw, kb = jax.random.split(key)
    fan_in = cin * k * k
    bound = 1.0 / math.sqrt(fan_in)
    w = jax.random.uniform(kw, (cout, cin, k, k), jnp.float32, -bound, bound)
    b = jax.random.uniform(kb, (cout,), jnp.float32, -bound, bound)
    return w, b


def _bn_params(c):
    # fresh nn.BatchNorm2d, eval mode: gamma=1, beta=0, running_mean=0, running_var=1
    return (jnp.ones((c,), jnp.float32), jnp.zeros((c,), jnp.float32),
            jnp.zeros((c,), jnp.float32), jnp.ones((c,), jnp.float32))


def _fold_conv1x1_bn(w, b, bn, eps=1e-5):
    """[Cout,Cin,1,1] conv + eval-mode BN -> ([Cin,Cout] weight, [Cout] bias)."""
    gamma, beta, mean, var = bn
    scale = gamma / jnp.sqrt(var + eps)
    w_flat = w[:, :, 0, 0].T * scale[None, :]                    # [Cin, Cout]
    bias = (b - mean) * scale + beta                             # [Cout]
    return w_flat, bias


def _pad_wb(w_flat, bias, k_pad, n_pad):
    """Zero-pad to lane-dense [k_pad, n_pad] bf16 weight + [1, n_pad] f32 bias."""
    cin, cout = w_flat.shape
    w_p = jnp.zeros((k_pad, n_pad), jnp.float32).at[:cin, :cout].set(w_flat)
    b_p = jnp.zeros((1, n_pad), jnp.float32).at[0, :cout].set(bias)
    return w_p.astype(jnp.bfloat16), b_p


class MAvlayerPallas:
    """MAvlayer with layer='ResBlock', use_SA=False, use_trans=False.

    forward: x[NCHW] -> AvgPool2d(avg_size, avg_size)
                      -> ResBlock(inc -> outc, k=1, stride=1, pad=0)  -> NCHW
    """
    # TODO(synk): use_SA / use_trans branches (SABlock / transformer EncoderLayer
    # stacks) are disabled in this config and not implemented here.

    def __init__(self, key, inc, outc, avg_size=2, kernel_size=3):
        del kernel_size   # only feeds the (disabled) SA branch; ResBlock here is 1x1
        self.inc, self.outc, self.avg_size = inc, outc, avg_size
        has_extra = (inc != outc)                 # ResBlock stride is 1 in MAvlayer
        k_pad = max(128, _round_up(inc, 128))     # lane-dense K
        n_pad = max(128, _round_up(outc, 128))    # lane-dense N (output lanes)
        if not has_extra:
            k_pad = n_pad = max(k_pad, n_pad)

        k1, k2, k3 = jax.random.split(key, 3)
        w1, b1 = _conv_params(k1, inc, outc, 1)
        w2, b2 = _conv_params(k2, outc, outc, 1)
        p = {"cout": outc, "k_pad": k_pad, "n_pad": n_pad, "has_extra": has_extra}
        w1f, b1f = _fold_conv1x1_bn(w1, b1, _bn_params(outc))
        w2f, b2f = _fold_conv1x1_bn(w2, b2, _bn_params(outc))
        p["w2"], p["b2"] = _pad_wb(w2f, b2f, n_pad, n_pad)
        we = be = None
        if has_extra:
            we, be = _conv_params(k3, inc, outc, 1)
            wef, bef = _fold_conv1x1_bn(we, be, _bn_params(outc))
            w1p, b1p = _pad_wb(w1f, b1f, k_pad, n_pad)
            wep, bep = _pad_wb(wef, bef, k_pad, n_pad)
            # conv1 and 1x1 shortcut share the same LHS tile -> one wide matmul.
            p["w1e"] = jnp.concatenate([w1p, wep], axis=1)       # [Kp, 2*Np] bf16
            p["b1e"] = jnp.concatenate([b1p, bep], axis=1)       # [1, 2*Np] f32
        else:
            p["w1"], p["b1"] = _pad_wb(w1f, b1f, k_pad, n_pad)
        self.params = p
        self._raw = dict(w1=w1, b1=b1, w2=w2, b2=b2, we=we, be=be)

    def _avg_pool_nhwc(self, x):
        a = self.avg_size
        if a <= 1:
            return x
        b, h, w, c = x.shape
        hc, wc = (h // a) * a, (w // a) * a          # PyTorch floor behavior
        x = x[:, :hc, :wc, :].reshape(b, hc // a, a, wc // a, a, c)
        return x.mean(axis=(2, 4))

    def __call__(self, x_nchw):
        # layout: accepts NCHW (PyTorch), computes in NHWC rows, returns NCHW.
        x = jnp.transpose(x_nchw, (0, 2, 3, 1)).astype(jnp.float32)
        x = self._avg_pool_nhwc(x)                    # AvgPool2d glue (plain JAX)
        b, hp, wp, _ = x.shape
        rows = x.reshape(b * hp * wp, self.inc)
        out = _resblock1x1(rows, self.params)         # fused Pallas ResBlock
        return jnp.transpose(out.reshape(b, hp, wp, self.outc), (0, 3, 1, 2))

    def reference(self, x_nchw):
        """Pure-JAX f32 reference (no Pallas) for correctness checking."""
        eps = 1e-5
        x = jnp.transpose(x_nchw, (0, 2, 3, 1)).astype(jnp.float32)
        x = self._avg_pool_nhwc(x)
        r = self._raw

        def conv_bn(v, w, b):
            y = jnp.einsum("bhwc,oc->bhwo", v, w[:, :, 0, 0]) + b
            return y / jnp.sqrt(1.0 + eps)            # fresh eval-mode BN

        y = jax.nn.relu(conv_bn(x, r["w1"], r["b1"]))
        z = conv_bn(y, r["w2"], r["b2"])
        s = conv_bn(x, r["we"], r["be"]) if self.params["has_extra"] else x
        return jnp.transpose(jax.nn.relu(z + s), (0, 3, 1, 2))


if __name__ == "__main__":
    key = jax.random.PRNGKey(0)
    pkey, xkey = jax.random.split(key)

    B, C_in, H, W = 2, 4, 16, 16
    C_out, avg_size = 8, 2

    model = MAvlayerPallas(pkey, C_in, C_out, avg_size=avg_size)
    x = jax.random.normal(xkey, (B, C_in, H, W), jnp.float32)

    fwd = jax.jit(model.__call__)
    y = jax.block_until_ready(fwd(x))

    assert y.shape == (B, C_out, H // avg_size, W // avg_size), y.shape
    assert bool(jnp.all(jnp.isfinite(y)))

    y_ref = model.reference(x)
    err = float(jnp.max(jnp.abs(y - y_ref)))
    assert jnp.allclose(y, y_ref, atol=5e-2, rtol=5e-2), err
    print("KERNEL_OK")
</pallas_src>

<mosaic_0001>
module attributes {stable_mosaic.version = 11 : i64} {
  func.func @_resblock1x1_extra_kernel(%arg0: i32, %arg1: memref<128x128xbf16, #tpu.memory_space<vmem>>, %arg2: memref<128x256xbf16, #tpu.memory_space<vmem>>, %arg3: memref<1x256xf32, #tpu.memory_space<vmem>>, %arg4: memref<128x128xbf16, #tpu.memory_space<vmem>>, %arg5: memref<1x128xf32, #tpu.memory_space<vmem>>, %arg6: memref<128x128xf32, #tpu.memory_space<vmem>>) attributes {dimension_semantics = [#tpu.dimension_semantics<parallel>], iteration_bounds = array<i64: 1>, scalar_prefetch = 0 : i64, scratch_operands = 0 : i64, tpu.core_type = #tpu.core_type<tc>, window_params = [{transform_indices = @transform_0, window_bounds = array<i64: 128, 128>}, {pipeline_mode = #tpu.pipeline_mode<synchronous>, transform_indices = @transform_1, window_bounds = array<i64: 128, 256>}, {pipeline_mode = #tpu.pipeline_mode<synchronous>, transform_indices = @transform_2, window_bounds = array<i64: 1, 256>}, {pipeline_mode = #tpu.pipeline_mode<synchronous>, transform_indices = @transform_3, window_bounds = array<i64: 128, 128>}, {pipeline_mode = #tpu.pipeline_mode<synchronous>, transform_indices = @transform_4, window_bounds = array<i64: 1, 128>}, {transform_indices = @transform_5, window_bounds = array<i64: 128, 128>}]} {
    %c0 = arith.constant 0 : index
    %c0_0 = arith.constant 0 : index
    %0 = vector.load %arg1[%c0, %c0_0] : memref<128x128xbf16, #tpu.memory_space<vmem>>, vector<128x128xbf16>
    %c0_1 = arith.constant 0 : index
    %c0_2 = arith.constant 0 : index
    %1 = vector.load %arg2[%c0_1, %c0_2] : memref<128x256xbf16, #tpu.memory_space<vmem>>, vector<128x256xbf16>
    %cst = arith.constant dense<0.000000e+00> : vector<128x256xf32>
    %2 = tpu.matmul %0, %1, %cst {dimension_numbers = #tpu.dot_dimension_numbers<[1], [0], [0], [1], [0, 0, 1, 1], [], []>} : vector<128x128xbf16>, vector<128x256xbf16>, vector<128x256xf32> -> vector<128x256xf32>
    %c0_3 = arith.constant 0 : index
    %c0_4 = arith.constant 0 : index
    %3 = vector.load %arg3[%c0_3, %c0_4] : memref<1x256xf32, #tpu.memory_space<vmem>>, vector<1x256xf32>
    %4 = vector.broadcast %3 : vector<1x256xf32> to vector<128x256xf32>
    %5 = arith.addf %2, %4 : vector<128x256xf32>
    %6 = vector.extract_strided_slice %5 {offsets = [0, 0], sizes = [128, 128], strides = [1, 1]} : vector<128x256xf32> to vector<128x128xf32>
    %cst_5 = arith.constant 0.000000e+00 : f32
    %7 = vector.broadcast %cst_5 : f32 to vector<128x128xf32>
    %8 = arith.maximumf %6, %7 : vector<128x128xf32>
    %9 = vector.extract_strided_slice %5 {offsets = [0, 128], sizes = [128, 128], strides = [1, 1]} : vector<128x256xf32> to vector<128x128xf32>
    %10 = arith.truncf %8 : vector<128x128xf32> to vector<128x128xbf16>
    %c0_6 = arith.constant 0 : index
    %c0_7 = arith.constant 0 : index
    %11 = vector.load %arg4[%c0_6, %c0_7] : memref<128x128xbf16, #tpu.memory_space<vmem>>, vector<128x128xbf16>
    %cst_8 = arith.constant dense<0.000000e+00> : vector<128x128xf32>
    %12 = tpu.matmul %10, %11, %cst_8 {dimension_numbers = #tpu.dot_dimension_numbers<[1], [0], [0], [1], [0, 0, 1, 1], [], []>} : vector<128x128xbf16>, vector<128x128xbf16>, vector<128x128xf32> -> vector<128x128xf32>
    %c0_9 = arith.constant 0 : index
    %c0_10 = arith.constant 0 : index
    %13 = vector.load %arg5[%c0_9, %c0_10] : memref<1x128xf32, #tpu.memory_space<vmem>>, vector<1x128xf32>
    %14 = vector.broadcast %13 : vector<1x128xf32> to vector<128x128xf32>
    %15 = arith.addf %12, %14 : vector<128x128xf32>
    %16 = arith.addf %15, %9 : vector<128x128xf32>
    %cst_11 = arith.constant 0.000000e+00 : f32
    %17 = vector.broadcast %cst_11 : f32 to vector<128x128xf32>
    %18 = arith.maximumf %16, %17 : vector<128x128xf32>
    %c0_12 = arith.constant 0 : index
    %c0_13 = arith.constant 0 : index
    %19 = vector.load %arg6[%c0_12, %c0_13] : memref<128x128xf32, #tpu.memory_space<vmem>>, vector<128x128xf32>
    tpu.vector_store %arg6[%c0_12, %c0_13], %18 {strides = array<i32>} : memref<128x128xf32, #tpu.memory_space<vmem>>, vector<128x128xf32>,
    return
  }
  func.func @transform_0(%arg0: i32) -> (i32, i32) {
    %c0_i32 = arith.constant 0 : i32
    %c0_i32_0 = arith.constant 0 : i32
    return %arg0, %c0_i32 : i32, i32
  }
  func.func @transform_1(%arg0: i32) -> (i32, i32) {
    %c0_i32 = arith.constant 0 : i32
    %c0_i32_0 = arith.constant 0 : i32
    %c0_i32_1 = arith.constant 0 : i32
    return %c0_i32, %c0_i32_0 : i32, i32
  }
  func.func @transform_2(%arg0: i32) -> (i32, i32) {
    %c0_i32 = arith.constant 0 : i32
    %c0_i32_0 = arith.constant 0 : i32
    %c0_i32_1 = arith.constant 0 : i32
    return %c0_i32, %c0_i32_0 : i32, i32
  }
  func.func @transform_3(%arg0: i32) -> (i32, i32) {
    %c0_i32 = arith.constant 0 : i32
    %c0_i32_0 = arith.constant 0 : i32
    %c0_i32_1 = arith.constant 0 : i32
    return %c0_i32, %c0_i32_0 : i32, i32
  }
  func.func @transform_4(%arg0: i32) -> (i32, i32) {
    %c0_i32 = arith.constant 0 : i32
    %c0_i32_0 = arith.constant 0 : i32
    %c0_i32_1 = arith.constant 0 : i32
    return %c0_i32, %c0_i32_0 : i32, i32
  }
  func.func @transform_5(%arg0: i32) -> (i32, i32) {
    %c0_i32 = arith.constant 0 : i32
    %c0_i32_0 = arith.constant 0 : i32
    return %arg0, %c0_i32 : i32, i32
  }
}

</mosaic_0001>

<llo_original>
// kernel: a_call__.1
$region0: #{a_call__.1}
  #allocation0 [shape = 'u32[]', space=smem, size = 0x4, offset = 0x4, fixed_abs, tag = 'smem constant byte address 0x4 - core index']
  #allocation1 [shape = 'u32[144,128]{1,0:T(1,128)}', space=vmem, size = 0x12000, scoped, tag = 'internal scratch']
  %s0 = inlined_call_operand.vmem [shape: bf16[128,128], index: 0, kind: input, shape index: {}]
  %s1 = inlined_call_operand.vmem [shape: bf16[128,256], index: 1, kind: input, shape index: {}]
  %s2 = inlined_call_operand.vmem [shape: f32[1,256], index: 2, kind: input, shape index: {}]
  %s3 = inlined_call_operand.vmem [shape: bf16[128,128], index: 3, kind: input, shape index: {}]
  %s4 = inlined_call_operand.vmem [shape: f32[1,128], index: 4, kind: input, shape index: {}]
  %s5 = inlined_call_operand.vmem [shape: f32[128,128], index: 5, kind: output, shape index: {}]
  %s6 = sld [smem:[#allocation0]]
  $region30: #{a_call__.1} parent=0
    _
  %s8 = ssub.s32 1, %s6
  %s9 = scalar_select 0, %s8, %s6
  // Predicated region
  $region2: #{a_call__.1} parent=0 // pred_check
    _
  $region3: #{a_call__.1} parent=0 // pred_check_branch
    %11 = sbr.rel (0) target = $region5
  $region4: #{a_call__.1} parent=0 // pred_region
    _
  $region5: #{a_call__.1} parent=0 // pred_fallthru
    _
  // Predicated region
  $region6: #{a_call__.1} parent=0 // pred_check
    _
  $region7: #{a_call__.1} parent=0 // pred_check_branch
    %13 = sbr.rel (0) target = $region9
  $region8: #{a_call__.1} parent=0 // pred_region
    _
  $region9: #{a_call__.1} parent=0 // pred_fallthru
    _
  // Predicated region
  $region10: #{a_call__.1} parent=0 // pred_check
    _
  $region11: #{a_call__.1} parent=0 // pred_check_branch
    %15 = sbr.rel (0) target = $region13
  $region12: #{a_call__.1} parent=0 // pred_region
    _
  $region13: #{a_call__.1} parent=0 // pred_fallthru
    _
  // Predicated region
  $region14: #{a_call__.1} parent=0 // pred_check
    _
  $region15: #{a_call__.1} parent=0 // pred_check_branch
    %17 = sbr.rel (0) target = $region17
  $region16: #{a_call__.1} parent=0 // pred_region
    _
  $region17: #{a_call__.1} parent=0 // pred_fallthru
    _
  // Predicated region
  $region18: #{a_call__.1} parent=0 // pred_check
    _
  $region19: #{a_call__.1} parent=0 // pred_check_branch
    %19 = sbr.rel (0) target = $region21
  $region20: #{a_call__.1} parent=0 // pred_region
    _
  $region21: #{a_call__.1} parent=0 // pred_fallthru
    _
  %v21 = vld [vmem:[%s0] sm:$0xf]
  %v22 = vld [vmem:[%s0 + $0x4] sm:$0xf]
  %v23 = vld [vmem:[%s0 + $0x8] sm:$0xf]
  %v24 = vld [vmem:[%s0 + $0xc] sm:$0xf]
  %v25 = vld [vmem:[%s0 + $0x10] sm:$0xf]
  %v26 = vld [vmem:[%s0 + $0x14] sm:$0xf]
  %v27 = vld [vmem:[%s0 + $0x18] sm:$0xf]
  %v28 = vld [vmem:[%s0 + $0x1c] sm:$0xf]
  %v29 = vld [vmem:[%s0 + $0x20] sm:$0xf]
  %v30 = vld [vmem:[%s0 + $0x24] sm:$0xf]
  %v31 = vld [vmem:[%s0 + $0x28] sm:$0xf]
  %v32 = vld [vmem:[%s0 + $0x2c] sm:$0xf]
  %v33 = vld [vmem:[%s0 + $0x30] sm:$0xf]
  %v34 = vld [vmem:[%s0 + $0x34] sm:$0xf]
  %v35 = vld [vmem:[%s0 + $0x38] sm:$0xf]
  %v36 = vld [vmem:[%s0 + $0x3c] sm:$0xf]
  %v37 = vld [vmem:[%s1] sm:$0xff]
  %v38 = vld [vmem:[%s1 + $0x8] sm:$0xff]
  %v39 = vld [vmem:[%s1 + $0x10] sm:$0xff]
  %v40 = vld [vmem:[%s1 + $0x18] sm:$0xff]
  %v41 = vld [vmem:[%s1 + $0x20] sm:$0xff]
  %v42 = vld [vmem:[%s1 + $0x28] sm:$0xff]
  %v43 = vld [vmem:[%s1 + $0x30] sm:$0xff]
  %v44 = vld [vmem:[%s1 + $0x38] sm:$0xff]
  %v45 = vld [vmem:[%s1 + $0x40] sm:$0xff]
  %v46 = vld [vmem:[%s1 + $0x48] sm:$0xff]
  %v47 = vld [vmem:[%s1 + $0x50] sm:$0xff]
  %v48 = vld [vmem:[%s1 + $0x58] sm:$0xff]
  %v49 = vld [vmem:[%s1 + $0x60] sm:$0xff]
  %v50 = vld [vmem:[%s1 + $0x68] sm:$0xff]
  %v51 = vld [vmem:[%s1 + $0x70] sm:$0xff]
  %v52 = vld [vmem:[%s1 + $0x78] sm:$0xff]
  %v53 = vld [vmem:[%s2] sm:$0x3]
  %v55 = vlaneseq
  %v56 = vshrl.u32 %v55, 7
  %v57 = vsub.s32 0, %v56
  %v58 = vrot.slane %v53, %v57
  %v59 = vlaneseq
  %v60 = vshrl.u32 %v59, 7
  %v61 = vsub.s32 1, %v60
  %v62 = vrot.slane %v53, %v61
  %v81 = vunpack.c.l.b16 %v21
  %v82 = vunpack.c.l.b16 %v22
  %v83 = vunpack.c.l.b16 %v23
  %v84 = vunpack.c.l.b16 %v24
  %v85 = vunpack.c.l.b16 %v25
  %v86 = vunpack.c.l.b16 %v26
  %v87 = vunpack.c.l.b16 %v27
  %v88 = vunpack.c.l.b16 %v28
  %v89 = vunpack.c.l.b16 %v29
  %v90 = vunpack.c.l.b16 %v30
  %v91 = vunpack.c.l.b16 %v31
  %v92 = vunpack.c.l.b16 %v32
  %v93 = vunpack.c.l.b16 %v33
  %v94 = vunpack.c.l.b16 %v34
  %v95 = vunpack.c.l.b16 %v35
  %v96 = vunpack.c.l.b16 %v36
  %v97 = vpack.c.b16 %v82, %v81
  %v98 = vpack.c.b16 %v84, %v83
  %v99 = vpack.c.b16 %v86, %v85
  %v100 = vpack.c.b16 %v88, %v87
  %v101 = vpack.c.b16 %v90, %v89
  %v102 = vpack.c.b16 %v92, %v91
  %v103 = vpack.c.b16 %v94, %v93
  %v104 = vpack.c.b16 %v96, %v95
  %v129 = vunpack.c.l.b16 %v37
  %v130 = vunpack.c.h.b16 %v37
  %v131 = vunpack.c.l.b16 %v38
  %v132 = vunpack.c.h.b16 %v38
  %v133 = vunpack.c.l.b16 %v39
  %v134 = vunpack.c.h.b16 %v39
  %v135 = vunpack.c.l.b16 %v40
  %v136 = vunpack.c.h.b16 %v40
  %v137 = vunpack.c.l.b16 %v41
  %v138 = vunpack.c.h.b16 %v41
  %v139 = vunpack.c.l.b16 %v42
  %v140 = vunpack.c.h.b16 %v42
  %v141 = vunpack.c.l.b16 %v43
  %v142 = vunpack.c.h.b16 %v43
  %v143 = vunpack.c.l.b16 %v44
  %v144 = vunpack.c.h.b16 %v44
  %v145 = vunpack.c.l.b16 %v45
  %v146 = vunpack.c.h.b16 %v45
  %v147 = vunpack.c.l.b16 %v46
  %v148 = vunpack.c.h.b16 %v46
  %v149 = vunpack.c.l.b16 %v47
  %v150 = vunpack.c.h.b16 %v47
  %v151 = vunpack.c.l.b16 %v48
  %v152 = vunpack.c.h.b16 %v48
  %v153 = vunpack.c.l.b16 %v49
  %v154 = vunpack.c.h.b16 %v49
  %v155 = vunpack.c.l.b16 %v50
  %v156 = vunpack.c.h.b16 %v50
  %v157 = vunpack.c.l.b16 %v51
  %v158 = vunpack.c.h.b16 %v51
  %v159 = vunpack.c.l.b16 %v52
  %v160 = vunpack.c.h.b16 %v52
  %v161 = vpack.c.b16 %v131, %v129
  %v162 = vpack.c.b16 %v132, %v130
  %v163 = vpack.c.b16 %v135, %v133
  %v164 = vpack.c.b16 %v136, %v134
  %v165 = vpack.c.b16 %v139, %v137
  %v166 = vpack.c.b16 %v140, %v138
  %v167 = vpack.c.b16 %v143, %v141
  %v168 = vpack.c.b16 %v144, %v142
  %v169 = vpack.c.b16 %v147, %v145
  %v170 = vpack.c.b16 %v148, %v146
  %v171 = vpack.c.b16 %v151, %v149
  %v172 = vpack.c.b16 %v152, %v150
  %v173 = vpack.c.b16 %v155, %v153
  %v174 = vpack.c.b16 %v156, %v154
  %v175 = vpack.c.b16 %v159, %v157
  %v176 = vpack.c.b16 %v160, %v158
  %193 = vmatprep.subr.bf16.mxu0 %v162
  %194 = vmatpush1.bf16.msra.mxu0 %v161
  %195 = vmatprep.subr.bf16.mxu0 %v164
  %196 = vmatpush1.bf16.msra.mxu0 %v163
  %197 = vmatprep.subr.bf16.mxu0 %v166
  %198 = vmatpush1.bf16.msra.mxu0 %v165
  %199 = vmatprep.subr.bf16.mxu0 %v168
  %200 = vmatpush1.bf16.msra.mxu0 %v167
  %201 = vmatprep.subr.bf16.mxu0 %v170
  %202 = vmatpush1.bf16.msra.mxu0 %v169
  %203 = vmatprep.subr.bf16.mxu0 %v172
  %204 = vmatpush1.bf16.msra.mxu0 %v171
  %205 = vmatprep.subr.bf16.mxu0 %v174
  %206 = vmatpush1.bf16.msra.mxu0 %v173
  %207 = vmatprep.subr.bf16.mxu0 %v176
  %208 = vmatpush1.bf16.msra.mxu0 %v175
  %209 = vmatprep.subr.bf16.mxu0 0
  %210 = vmatpush1.bf16.msra.mxu0 0
  %211 = vmatprep.subr.bf16.mxu0 0
  %212 = vmatpush1.bf16.msra.mxu0 0
  %213 = vmatprep.subr.bf16.mxu0 0
  %214 = vmatpush1.bf16.msra.mxu0 0
  %215 = vmatprep.subr.bf16.mxu0 0
  %216 = vmatpush1.bf16.msra.mxu0 0
  %217 = vmatprep.subr.bf16.mxu0 0
  %218 = vmatpush1.bf16.msra.mxu0 0
  %219 = vmatprep.subr.bf16.mxu0 0
  %220 = vmatpush1.bf16.msra.mxu0 0
  %221 = vmatprep.subr.bf16.mxu0 0
  %222 = vmatpush1.bf16.msra.mxu0 0
  %223 = vmatprep.subr.bf16.mxu0 0
  %224 = vmatpush1.bf16.msra.mxu0 0
  %225 = vmatprep.mubr.bf16.mxu0 0
  %226 = vmatmul.mubr.bf16.gmra.mrb[0].mxu0 %v97
  %v227 = vpop.f32.mrb[0].mxu0
  %v228 = vadd.f32 %v58, %v227
  %v229 = vpop.f32.mrb[0].mxu0
  %v230 = vadd.f32 %v62, %v229
  %v231 = vpop.f32.mrb[0].mxu0
  %v232 = vadd.f32 %v58, %v231
  %v233 = vpop.f32.mrb[0].mxu0
  %v234 = vadd.f32 %v62, %v233
  %235 = vmatprep.mubr.bf16.mxu0 0
  %236 = vmatmul.mubr.bf16.gmra.mrb[0].mxu0 %v98
  %v237 = vpop.f32.mrb[0].mxu0
  %v238 = vadd.f32 %v58, %v237
  %v239 = vpop.f32.mrb[0].mxu0
  %v240 = vadd.f32 %v62, %v239
  %v241 = vpop.f32.mrb[0].mxu0
  %v242 = vadd.f32 %v58, %v241
  %v243 = vpop.f32.mrb[0].mxu0
  %v244 = vadd.f32 %v62, %v243
  %245 = vmatprep.mubr.bf16.mxu0 0
  %246 = vmatmul.mubr.bf16.gmra.mrb[0].mxu0 %v99
  %v247 = vpop.f32.mrb[0].mxu0
  %v248 = vadd.f32 %v58, %v247
  %v249 = vpop.f32.mrb[0].mxu0
  %v250 = vadd.f32 %v62, %v249
  %v251 = vpop.f32.mrb[0].mxu0
  %v252 = vadd.f32 %v58, %v251
  %v253 = vpop.f32.mrb[0].mxu0
  %v254 = vadd.f32 %v62, %v253
  %255 = vmatprep.mubr.bf16.mxu0 0
  %256 = vmatmul.mubr.bf16.gmra.mrb[0].mxu0 %v100
  %v257 = vpop.f32.mrb[0].mxu0
  %v258 = vadd.f32 %v58, %v257
  %v259 = vpop.f32.mrb[0].mxu0
  %v260 = vadd.f32 %v62, %v259
  %v261 = vpop.f32.mrb[0].mxu0
  %v262 = vadd.f32 %v58, %v261
  %v263 = vpop.f32.mrb[0].mxu0
  %v264 = vadd.f32 %v62, %v263
  %265 = vmatprep.mubr.bf16.mxu0 0
  %266 = vmatmul.mubr.bf16.gmra.mrb[0].mxu0 %v101
  %v267 = vpop.f32.mrb[0].mxu0
  %v268 = vadd.f32 %v58, %v267
  %v269 = vpop.f32.mrb[0].mxu0
  %v270 = vadd.f32 %v62, %v269
  %v271 = vpop.f32.mrb[0].mxu0
  %v272 = vadd.f32 %v58, %v271
  %v273 = vpop.f32.mrb[0].mxu0
  %v274 = vadd.f32 %v62, %v273
  %275 = vmatprep.mubr.bf16.mxu0 0
  %276 = vmatmul.mubr.bf16.gmra.mrb[0].mxu0 %v102
  %v277 = vpop.f32.mrb[0].mxu0
  %v278 = vadd.f32 %v58, %v277
  %v279 = vpop.f32.mrb[0].mxu0
  %v280 = vadd.f32 %v62, %v279
  %v281 = vpop.f32.mrb[0].mxu0
  %v282 = vadd.f32 %v58, %v281
  %v283 = vpop.f32.mrb[0].mxu0
  %v284 = vadd.f32 %v62, %v283
  %285 = vmatprep.mubr.bf16.mxu0 0
  %286 = vmatmul.mubr.bf16.gmra.mrb[0].mxu0 %v103
  %v287 = vpop.f32.mrb[0].mxu0
  %v288 = vadd.f32 %v58, %v287
  %v289 = vpop.f32.mrb[0].mxu0
  %v290 = vadd.f32 %v62, %v289
  %v291 = vpop.f32.mrb[0].mxu0
  %v292 = vadd.f32 %v58, %v291
  %v293 = vpop.f32.mrb[0].mxu0
  %v294 = vadd.f32 %v62, %v293
  %295 = vmatprep.mubr.bf16.mxu0 0
  %296 = vmatmul.mubr.bf16.gmra.mrb[0].mxu0 %v104
  %v297 = vpop.f32.mrb[0].mxu0
  %v298 = vadd.f32 %v58, %v297
  %v299 = vpop.f32.mrb[0].mxu0
  %v300 = vadd.f32 %v62, %v299
  %v301 = vpop.f32.mrb[0].mxu0
  %v302 = vadd.f32 %v58, %v301
  %v303 = vpop.f32.mrb[0].mxu0
  %v304 = vadd.f32 %v62, %v303
  %305 = vdwg.mxu0
  %v306 = vmax.f32 %v228, 0.0
  %v307 = vmax.f32 %v232, 0.0
  %v308 = vmax.f32 %v238, 0.0
  %v309 = vmax.f32 %v242, 0.0
  %v310 = vmax.f32 %v248, 0.0
  %v311 = vmax.f32 %v252, 0.0
  %v312 = vmax.f32 %v258, 0.0
  %v313 = vmax.f32 %v262, 0.0
  %v314 = vmax.f32 %v268, 0.0
  %v315 = vmax.f32 %v272, 0.0
  %v316 = vmax.f32 %v278, 0.0
  %v317 = vmax.f32 %v282, 0.0
  %v318 = vmax.f32 %v288, 0.0
  %v319 = vmax.f32 %v292, 0.0
  %v320 = vmax.f32 %v298, 0.0
  %v321 = vmax.f32 %v302, 0.0
  %v322 = vpack.c.bf16 %v307, %v306
  %v323 = vpack.c.bf16 %v309, %v308
  %v324 = vpack.c.bf16 %v311, %v310
  %v325 = vpack.c.bf16 %v313, %v312
  %v326 = vpack.c.bf16 %v315, %v314
  %v327 = vpack.c.bf16 %v317, %v316
  %v328 = vpack.c.bf16 %v319, %v318
  %v329 = vpack.c.bf16 %v321, %v320
  %v330 = vld [vmem:[%s3] sm:$0xf]
  %v331 = vld [vmem:[%s3 + $0x4] sm:$0xf]
  %v332 = vld [vmem:[%s3 + $0x8] sm:$0xf]
  %v333 = vld [vmem:[%s3 + $0xc] sm:$0xf]
  %v334 = vld [vmem:[%s3 + $0x10] sm:$0xf]
  %v335 = vld [vmem:[%s3 + $0x14] sm:$0xf]
  %v336 = vld [vmem:[%s3 + $0x18] sm:$0xf]
  %v337 = vld [vmem:[%s3 + $0x1c] sm:$0xf]
  %v338 = vld [vmem:[%s3 + $0x20] sm:$0xf]
  %v339 = vld [vmem:[%s3 + $0x24] sm:$0xf]
  %v340 = vld [vmem:[%s3 + $0x28] sm:$0xf]
  %v341 = vld [vmem:[%s3 + $0x2c] sm:$0xf]
  %v342 = vld [vmem:[%s3 + $0x30] sm:$0xf]
  %v343 = vld [vmem:[%s3 + $0x34] sm:$0xf]
  %v344 = vld [vmem:[%s3 + $0x38] sm:$0xf]
  %v345 = vld [vmem:[%s3 + $0x3c] sm:$0xf]
  %v346 = vld [vmem:[%s4] sm:$0x1]
  %v348 = vlaneseq
  %v349 = vshrl.u32 %v348, 7
  %v350 = vsub.s32 0, %v349
  %v351 = vrot.slane %v346, %v350
  %v369 = vunpack.c.l.b16 %v330
  %v370 = vunpack.c.l.b16 %v331
  %v371 = vunpack.c.l.b16 %v332
  %v372 = vunpack.c.l.b16 %v333
  %v373 = vunpack.c.l.b16 %v334
  %v374 = vunpack.c.l.b16 %v335
  %v375 = vunpack.c.l.b16 %v336
  %v376 = vunpack.c.l.b16 %v337
  %v377 = vunpack.c.l.b16 %v338
  %v378 = vunpack.c.l.b16 %v339
  %v379 = vunpack.c.l.b16 %v340
  %v380 = vunpack.c.l.b16 %v341
  %v381 = vunpack.c.l.b16 %v342
  %v382 = vunpack.c.l.b16 %v343
  %v383 = vunpack.c.l.b16 %v344
  %v384 = vunpack.c.l.b16 %v345
  %v385 = vpack.c.b16 %v370, %v369
  %v386 = vpack.c.b16 %v372, %v371
  %v387 = vpack.c.b16 %v374, %v373
  %v388 = vpack.c.b16 %v376, %v375
  %v389 = vpack.c.b16 %v378, %v377
  %v390 = vpack.c.b16 %v380, %v379
  %v391 = vpack.c.b16 %v382, %v381
  %v392 = vpack.c.b16 %v384, %v383
  %401 = vmatprep.subr.bf16.mxu0 0
  %402 = vmatpush1.bf16.msra.mxu0 %v385
  %403 = vmatprep.subr.bf16.mxu0 0
  %404 = vmatpush1.bf16.msra.mxu0 %v386
  %405 = vmatprep.subr.bf16.mxu0 0
  %406 = vmatpush1.bf16.msra.mxu0 %v387
  %407 = vmatprep.subr.bf16.mxu0 0
  %408 = vmatpush1.bf16.msra.mxu0 %v388
  %409 = vmatprep.subr.bf16.mxu0 0
  %410 = vmatpush1.bf16.msra.mxu0 %v389
  %411 = vmatprep.subr.bf16.mxu0 0
  %412 = vmatpush1.bf16.msra.mxu0 %v390
  %413 = vmatprep.subr.bf16.mxu0 0
  %414 = vmatpush1.bf16.msra.mxu0 %v391
  %415 = vmatprep.subr.bf16.mxu0 0
  %416 = vmatpush1.bf16.msra.mxu0 %v392
  %417 = vmatprep.subr.bf16.mxu0 0
  %418 = vmatpush1.bf16.msra.mxu0 0
  %419 = vmatprep.subr.bf16.mxu0 0
  %420 = vmatpush1.bf16.msra.mxu0 0
  %421 = vmatprep.subr.bf16.mxu0 0
  %422 = vmatpush1.bf16.msra.mxu0 0
  %423 = vmatprep.subr.bf16.mxu0 0
  %424 = vmatpush1.bf16.msra.mxu0 0
  %425 = vmatprep.subr.bf16.mxu0 0
  %426 = vmatpush1.bf16.msra.mxu0 0
  %427 = vmatprep.subr.bf16.mxu0 0
  %428 = vmatpush1.bf16.msra.mxu0 0
  %429 = vmatprep.subr.bf16.mxu0 0
  %430 = vmatpush1.bf16.msra.mxu0 0
  %431 = vmatprep.subr.bf16.mxu0 0
  %432 = vmatpush1.bf16.msra.mxu0 0
  %433 = vmatprep.mubr.bf16.mxu0 0
  %434 = vmatmul.mubr.bf16.gmra.mrb[0].mxu0 %v322
  %v435 = vpop.f32.mrb[0].mxu0
  %v436 = vadd.f32 %v351, %v435
  %v437 = vpop.f32.mrb[0].mxu0
  %v438 = vpop.f32.mrb[0].mxu0
  %v439 = vadd.f32 %v351, %v438
  %v440 = vpop.f32.mrb[0].mxu0
  %441 = vmatprep.mubr.bf16.mxu0 0
  %442 = vmatmul.mubr.bf16.gmra.mrb[0].mxu0 %v323
  %v443 = vpop.f32.mrb[0].mxu0
  %v444 = vadd.f32 %v351, %v443
  %v445 = vpop.f32.mrb[0].mxu0
  %v446 = vpop.f32.mrb[0].mxu0
  %v447 = vadd.f32 %v351, %v446
  %v448 = vpop.f32.mrb[0].mxu0
  %449 = vmatprep.mubr.bf16.mxu0 0
  %450 = vmatmul.mubr.bf16.gmra.mrb[0].mxu0 %v324
  %v451 = vpop.f32.mrb[0].mxu0
  %v452 = vadd.f32 %v351, %v451
  %v453 = vpop.f32.mrb[0].mxu0
  %v454 = vpop.f32.mrb[0].mxu0
  %v455 = vadd.f32 %v351, %v454
  %v456 = vpop.f32.mrb[0].mxu0
  %457 = vmatprep.mubr.bf16.mxu0 0
  %458 = vmatmul.mubr.bf16.gmra.mrb[0].mxu0 %v325
  %v459 = vpop.f32.mrb[0].mxu0
  %v460 = vadd.f32 %v351, %v459
  %v461 = vpop.f32.mrb[0].mxu0
  %v462 = vpop.f32.mrb[0].mxu0
  %v463 = vadd.f32 %v351, %v462
  %v464 = vpop.f32.mrb[0].mxu0
  %465 = vmatprep.mubr.bf16.mxu0 0
  %466 = vmatmul.mubr.bf16.gmra.mrb[0].mxu0 %v326
  %v467 = vpop.f32.mrb[0].mxu0
  %v468 = vadd.f32 %v351, %v467
  %v469 = vpop.f32.mrb[0].mxu0
  %v470 = vpop.f32.mrb[0].mxu0
  %v471 = vadd.f32 %v351, %v470
  %v472 = vpop.f32.mrb[0].mxu0
  %473 = vmatprep.mubr.bf16.mxu0 0
  %474 = vmatmul.mubr.bf16.gmra.mrb[0].mxu0 %v327
  %v475 = vpop.f32.mrb[0].mxu0
  %v476 = vadd.f32 %v351, %v475
  %v477 = vpop.f32.mrb[0].mxu0
  %v478 = vpop.f32.mrb[0].mxu0
  %v479 = vadd.f32 %v351, %v478
  %v480 = vpop.f32.mrb[0].mxu0
  %481 = vmatprep.mubr.bf16.mxu0 0
  %482 = vmatmul.mubr.bf16.gmra.mrb[0].mxu0 %v328
  %v483 = vpop.f32.mrb[0].mxu0
  %v484 = vadd.f32 %v351, %v483
  %v485 = vpop.f32.mrb[0].mxu0
  %v486 = vpop.f32.mrb[0].mxu0
  %v487 = vadd.f32 %v351, %v486
  %v488 = vpop.f32.mrb[0].mxu0
  %489 = vmatprep.mubr.bf16.mxu0 0
  %490 = vmatmul.mubr.bf16.gmra.mrb[0].mxu0 %v329
  %v491 = vpop.f32.mrb[0].mxu0
  %v492 = vadd.f32 %v351, %v491
  %v493 = vpop.f32.mrb[0].mxu0
  %v494 = vpop.f32.mrb[0].mxu0
  %v495 = vadd.f32 %v351, %v494
  %v496 = vpop.f32.mrb[0].mxu0
  %497 = vdwg.mxu0
  %v498 = vadd.f32 %v436, %v230
  %v499 = vadd.f32 %v439, %v234
  %v500 = vadd.f32 %v444, %v240
  %v501 = vadd.f32 %v447, %v244
  %v502 = vadd.f32 %v452, %v250
  %v503 = vadd.f32 %v455, %v254
  %v504 = vadd.f32 %v460, %v260
  %v505 = vadd.f32 %v463, %v264
  %v506 = vadd.f32 %v468, %v270
  %v507 = vadd.f32 %v471, %v274
  %v508 = vadd.f32 %v476, %v280
  %v509 = vadd.f32 %v479, %v284
  %v510 = vadd.f32 %v484, %v290
  %v511 = vadd.f32 %v487, %v294
  %v512 = vadd.f32 %v492, %v300
  %v513 = vadd.f32 %v495, %v304
  %v514 = vmax.f32 %v498, 0.0
  %v515 = vmax.f32 %v499, 0.0
  %v516 = vmax.f32 %v500, 0.0
  %v517 = vmax.f32 %v501, 0.0
  %v518 = vmax.f32 %v502, 0.0
  %v519 = vmax.f32 %v503, 0.0
  %v520 = vmax.f32 %v504, 0.0
  %v521 = vmax.f32 %v505, 0.0
  %v522 = vmax.f32 %v506, 0.0
  %v523 = vmax.f32 %v507, 0.0
  %v524 = vmax.f32 %v508, 0.0
  %v525 = vmax.f32 %v509, 0.0
  %v526 = vmax.f32 %v510, 0.0
  %v527 = vmax.f32 %v511, 0.0
  %v528 = vmax.f32 %v512, 0.0
  %v529 = vmax.f32 %v513, 0.0
  %530 = vst [vmem:[%s5] sm:$0xff] %v514
  %531 = vst [vmem:[%s5 + $0x8] sm:$0xff] %v515
  %532 = vst [vmem:[%s5 + $0x10] sm:$0xff] %v516
  %533 = vst [vmem:[%s5 + $0x18] sm:$0xff] %v517
  %534 = vst [vmem:[%s5 + $0x20] sm:$0xff] %v518
  %535 = vst [vmem:[%s5 + $0x28] sm:$0xff] %v519
  %536 = vst [vmem:[%s5 + $0x30] sm:$0xff] %v520
  %537 = vst [vmem:[%s5 + $0x38] sm:$0xff] %v521
  %538 = vst [vmem:[%s5 + $0x40] sm:$0xff] %v522
  %539 = vst [vmem:[%s5 + $0x48] sm:$0xff] %v523
  %540 = vst [vmem:[%s5 + $0x50] sm:$0xff] %v524
  %541 = vst [vmem:[%s5 + $0x58] sm:$0xff] %v525
  %542 = vst [vmem:[%s5 + $0x60] sm:$0xff] %v526
  %543 = vst [vmem:[%s5 + $0x68] sm:$0xff] %v527
  %544 = vst [vmem:[%s5 + $0x70] sm:$0xff] %v528
  %545 = vst [vmem:[%s5 + $0x78] sm:$0xff] %v529
  // Predicated region
  $region22: #{a_call__.1} parent=0 // pred_check
    _
  $region23: #{a_call__.1} parent=0 // pred_check_branch
    %547 = sbr.rel (0) target = $region25
  $region24: #{a_call__.1} parent=0 // pred_region
    _
  $region25: #{a_call__.1} parent=0 // pred_fallthru
    _
  // Predicated region
  $region26: #{a_call__.1} parent=0 // pred_check
    _
  $region27: #{a_call__.1} parent=0 // pred_check_branch
    %549 = sbr.rel (0) target = $region29
  $region28: #{a_call__.1} parent=0 // pred_region
    _
  $region29: #{a_call__.1} parent=0 // pred_fallthru
    _

</llo_original>
